<compile_context>
chip_gen: v6e
topology: v6e:2x2x1
jax: 0.10.0
libtpu: 0.0.40
codegen_flags: <defaults>
</compile_context>

<pallas_src>
import functools

import jax
import jax.numpy as jnp
from jax.experimental import pallas as pl
from jax.experimental.pallas import tpu as pltpu


NEG_SLOPE = 0.01  # PyTorch leaky_relu default negative_slope


def _leaky_relu(x):
    return jnp.where(x > 0, x, NEG_SLOPE * x)


def _round_up(v, m):
    return (v + m - 1) // m * m


def gan3dpose_kernel(x_ref,
                     w1_ref, b1_ref,
                     w2_ref, b2_ref,
                     w3_ref, b3_ref,
                     w4_ref, b4_ref,
                     out_ref):
    # Compute dtype for the MXU operands (bf16); accumulation is f32 and all
    # bias / activation / residual math stays f32.
    cdt = w1_ref.dtype

    x = x_ref[...]  # already in compute dtype (wrapper casts + pads)

    # fc1 + LeakyReLU
    h1 = jnp.dot(x, w1_ref[...], preferred_element_type=jnp.float32) + b1_ref[...]
    x1 = _leaky_relu(h1)                                    # f32

    # fc2 + LeakyReLU
    h2 = jnp.dot(x1.astype(cdt), w2_ref[...],
                 preferred_element_type=jnp.float32) + b2_ref[...]
    x2 = _leaky_relu(h2)

    # fc3 + residual (x1) + LeakyReLU
    h3 = jnp.dot(x2.astype(cdt), w3_ref[...],
                 preferred_element_type=jnp.float32) + b3_ref[...]
    x3 = _leaky_relu(h3 + x1)

    # fc4 (no activation) -> lane-dense (padded) f32 output tile
    h4 = jnp.dot(x3.astype(cdt), w4_ref[...],
                 preferred_element_type=jnp.float32) + b4_ref[...]
    out_ref[...] = h4.astype(out_ref.dtype)


def gan3dpose_forward(x, params, *, batch_tile=None,
                      compute_dtype=jnp.bfloat16):
    """x: [B, n_inputs] float32. params: dict of f32 weights/biases.

    Returns [B, n_outputs] float32.  MXU math runs in `compute_dtype`
    (bf16 by default) with f32 accumulation.
    """
    B, n_in = x.shape
    n_unit = params["w1"].shape[1]
    n_out = params["w4"].shape[1]

    # Lane-pad the narrow input (34 -> 128) and output (17 -> 128) dims so the
    # fc1 feed is a clean K=128 tile and the output store is unmasked.
    n_in_p = _round_up(n_in, 128)
    n_out_p = _round_up(n_out, 128)

    # MXU-shaped batch tile.  256 fills a v6e/v7x pass (two 128 passes on
    # v5e); a grid of B_p // tb >= 2 lets v7x shard the batch over both TCs
    # and restores double-buffered pipelining of the x/out tiles.
    if batch_tile is None:
        batch_tile = 256 if B >= 256 else _round_up(B, 8)
    tb = batch_tile
    B_p = _round_up(B, tb)

    f32 = jnp.float32
    # Zero padding is numerically inert for the matmuls.
    x_p = jnp.zeros((B_p, n_in_p), compute_dtype)
    x_p = x_p.at[:B, :n_in].set(x.astype(compute_dtype))
    w1 = jnp.zeros((n_in_p, n_unit), compute_dtype)
    w1 = w1.at[:n_in, :].set(params["w1"].astype(compute_dtype))
    w2 = params["w2"].astype(compute_dtype)
    w3 = params["w3"].astype(compute_dtype)
    w4 = jnp.zeros((n_unit, n_out_p), compute_dtype)
    w4 = w4.at[:, :n_out].set(params["w4"].astype(compute_dtype))
    b1 = params["b1"].astype(f32)
    b2 = params["b2"].astype(f32)
    b3 = params["b3"].astype(f32)
    b4 = jnp.zeros((1, n_out_p), f32).at[:, :n_out].set(params["b4"].astype(f32))

    full = lambda i: (0, 0)  # weights/biases: one resident block for all steps
    # TODO(synk): once tb is pushed very large (v7x's 64 MiB VMEM), consider
    # pipeline_mode=pl.Buffered(1) on the weight specs to reclaim the unused
    # second weight buffer.

    out = pl.pallas_call(
        gan3dpose_kernel,
        out_shape=jax.ShapeDtypeStruct((B_p, n_out_p), f32),
        grid_spec=pltpu.PrefetchScalarGridSpec(
            num_scalar_prefetch=0,
            grid=(B_p // tb,),
            in_specs=[
                pl.BlockSpec((tb, n_in_p), lambda i: (i, 0)),    # x tile
                pl.BlockSpec((n_in_p, n_unit), full),            # w1
                pl.BlockSpec((1, n_unit), full),                 # b1
                pl.BlockSpec((n_unit, n_unit), full),            # w2
                pl.BlockSpec((1, n_unit), full),                 # b2
                pl.BlockSpec((n_unit, n_unit), full),            # w3
                pl.BlockSpec((1, n_unit), full),                 # b3
                pl.BlockSpec((n_unit, n_out_p), full),           # w4 (padded)
                pl.BlockSpec((1, n_out_p), full),                # b4 (padded)
            ],
            out_specs=pl.BlockSpec((tb, n_out_p), lambda i: (i, 0)),
        ),
        compiler_params=pltpu.CompilerParams(
            dimension_semantics=("parallel",)),
    )(x_p, w1, b1, w2, b2, w3, b3, w4, b4)

    return out[:B, :n_out]


def init_params(key, n_inputs, n_unit, n_outputs):
    ks = jax.random.split(key, 8)

    def lin(kw, kb, fan_in, fan_out):
        bound = 1.0 / jnp.sqrt(fan_in)
        w = jax.random.uniform(kw, (fan_in, fan_out), jnp.float32, -bound, bound)
        b = jax.random.uniform(kb, (1, fan_out), jnp.float32, -bound, bound)
        return w, b

    w1, b1 = lin(ks[0], ks[1], n_inputs, n_unit)
    w2, b2 = lin(ks[2], ks[3], n_unit, n_unit)
    w3, b3 = lin(ks[4], ks[5], n_unit, n_unit)
    w4, b4 = lin(ks[6], ks[7], n_unit, n_outputs)
    return dict(w1=w1, b1=b1, w2=w2, b2=b2, w3=w3, b3=b3, w4=w4, b4=b4)


def reference_forward(x, p, compute_dtype=jnp.bfloat16):
    """Pure-JAX reference replicating the kernel's bf16-operand / f32-acc path."""
    hp = jax.lax.Precision.HIGHEST
    q = lambda a: a.astype(compute_dtype).astype(jnp.float32)
    dot = lambda a, b: jnp.dot(q(a), q(b), precision=hp)
    x1 = _leaky_relu(dot(x, p["w1"]) + p["b1"])
    x2 = _leaky_relu(dot(x1, p["w2"]) + p["b2"])
    x3 = _leaky_relu(dot(x2, p["w3"]) + p["b3"] + x1)
    return dot(x3, p["w4"]) + p["b4"]


if __name__ == "__main__":
    # Small shapes consistent with the module:
    # generator mode -> n_outputs = n_inputs // 2
    B, n_inputs, n_unit = 8, 34, 256
    n_outputs = n_inputs // 2  # 17

    key = jax.random.PRNGKey(0)
    k_x, k_p = jax.random.split(key)
    x = jax.random.normal(k_x, (B, n_inputs), jnp.float32)
    params = init_params(k_p, n_inputs, n_unit, n_outputs)

    fwd = jax.jit(functools.partial(gan3dpose_forward))
    out = fwd(x, params)
    out = jax.block_until_ready(out)

    ref = reference_forward(x, params)
    assert out.shape == (B, n_outputs), out.shape
    assert jnp.allclose(out, ref, atol=5e-3, rtol=5e-3), "mismatch vs reference"

    print("KERNEL_OK")
</pallas_src>

<mosaic_0001>
module attributes {stable_mosaic.version = 11 : i64} {
  func.func @gan3dpose_kernel(%arg0: i32, %arg1: memref<8x128xbf16, #tpu.memory_space<vmem>>, %arg2: memref<128x256xbf16, #tpu.memory_space<vmem>>, %arg3: memref<1x256xf32, #tpu.memory_space<vmem>>, %arg4: memref<256x256xbf16, #tpu.memory_space<vmem>>, %arg5: memref<1x256xf32, #tpu.memory_space<vmem>>, %arg6: memref<256x256xbf16, #tpu.memory_space<vmem>>, %arg7: memref<1x256xf32, #tpu.memory_space<vmem>>, %arg8: memref<256x128xbf16, #tpu.memory_space<vmem>>, %arg9: memref<1x128xf32, #tpu.memory_space<vmem>>, %arg10: memref<8x128xf32, #tpu.memory_space<vmem>>) attributes {dimension_semantics = [#tpu.dimension_semantics<parallel>], iteration_bounds = array<i64: 1>, scalar_prefetch = 0 : i64, scratch_operands = 0 : i64, tpu.core_type = #tpu.core_type<tc>, window_params = [{transform_indices = @transform_0, window_bounds = array<i64: 8, 128>}, {pipeline_mode = #tpu.pipeline_mode<synchronous>, transform_indices = @transform_1, window_bounds = array<i64: 128, 256>}, {pipeline_mode = #tpu.pipeline_mode<synchronous>, transform_indices = @transform_2, window_bounds = array<i64: 1, 256>}, {pipeline_mode = #tpu.pipeline_mode<synchronous>, transform_indices = @transform_3, window_bounds = array<i64: 256, 256>}, {pipeline_mode = #tpu.pipeline_mode<synchronous>, transform_indices = @transform_4, window_bounds = array<i64: 1, 256>}, {pipeline_mode = #tpu.pipeline_mode<synchronous>, transform_indices = @transform_5, window_bounds = array<i64: 256, 256>}, {pipeline_mode = #tpu.pipeline_mode<synchronous>, transform_indices = @transform_6, window_bounds = array<i64: 1, 256>}, {pipeline_mode = #tpu.pipeline_mode<synchronous>, transform_indices = @transform_7, window_bounds = array<i64: 256, 128>}, {pipeline_mode = #tpu.pipeline_mode<synchronous>, transform_indices = @transform_8, window_bounds = array<i64: 1, 128>}, {transform_indices = @transform_9, window_bounds = array<i64: 8, 128>}]} {
    %c0 = arith.constant 0 : index
    %c0_0 = arith.constant 0 : index
    %0 = vector.load %arg1[%c0, %c0_0] : memref<8x128xbf16, #tpu.memory_space<vmem>>, vector<8x128xbf16>
    %c0_1 = arith.constant 0 : index
    %c0_2 = arith.constant 0 : index
    %1 = vector.load %arg2[%c0_1, %c0_2] : memref<128x256xbf16, #tpu.memory_space<vmem>>, vector<128x256xbf16>
    %cst = arith.constant dense<0.000000e+00> : vector<8x256xf32>
    %2 = tpu.matmul %0, %1, %cst {dimension_numbers = #tpu.dot_dimension_numbers<[1], [0], [0], [1], [0, 0, 1, 1], [], []>} : vector<8x128xbf16>, vector<128x256xbf16>, vector<8x256xf32> -> vector<8x256xf32>
    %c0_3 = arith.constant 0 : index
    %c0_4 = arith.constant 0 : index
    %3 = vector.load %arg3[%c0_3, %c0_4] : memref<1x256xf32, #tpu.memory_space<vmem>>, vector<1x256xf32>
    %4 = vector.broadcast %3 : vector<1x256xf32> to vector<8x256xf32>
    %5 = arith.addf %2, %4 : vector<8x256xf32>
    %cst_5 = arith.constant 0.000000e+00 : f32
    %6 = vector.broadcast %cst_5 : f32 to vector<8x256xf32>
    %7 = arith.cmpf ogt, %5, %6 : vector<8x256xf32>
    %cst_6 = arith.constant 0.00999999977 : f32
    %8 = vector.broadcast %cst_6 : f32 to vector<8x256xf32>
    %9 = arith.mulf %8, %5 : vector<8x256xf32>
    %10 = arith.select %7, %5, %9 : vector<8x256xi1>, vector<8x256xf32>
    %11 = arith.truncf %10 : vector<8x256xf32> to vector<8x256xbf16>
    %c0_7 = arith.constant 0 : index
    %c0_8 = arith.constant 0 : index
    %12 = vector.load %arg4[%c0_7, %c0_8] : memref<256x256xbf16, #tpu.memory_space<vmem>>, vector<256x256xbf16>
    %cst_9 = arith.constant dense<0.000000e+00> : vector<8x256xf32>
    %13 = tpu.matmul %11, %12, %cst_9 {dimension_numbers = #tpu.dot_dimension_numbers<[1], [0], [0], [1], [0, 0, 1, 1], [], []>} : vector<8x256xbf16>, vector<256x256xbf16>, vector<8x256xf32> -> vector<8x256xf32>
    %c0_10 = arith.constant 0 : index
    %c0_11 = arith.constant 0 : index
    %14 = vector.load %arg5[%c0_10, %c0_11] : memref<1x256xf32, #tpu.memory_space<vmem>>, vector<1x256xf32>
    %15 = vector.broadcast %14 : vector<1x256xf32> to vector<8x256xf32>
    %16 = arith.addf %13, %15 : vector<8x256xf32>
    %cst_12 = arith.constant 0.000000e+00 : f32
    %17 = vector.broadcast %cst_12 : f32 to vector<8x256xf32>
    %18 = arith.cmpf ogt, %16, %17 : vector<8x256xf32>
    %cst_13 = arith.constant 0.00999999977 : f32
    %19 = vector.broadcast %cst_13 : f32 to vector<8x256xf32>
    %20 = arith.mulf %19, %16 : vector<8x256xf32>
    %21 = arith.select %18, %16, %20 : vector<8x256xi1>, vector<8x256xf32>
    %22 = arith.truncf %21 : vector<8x256xf32> to vector<8x256xbf16>
    %c0_14 = arith.constant 0 : index
    %c0_15 = arith.constant 0 : index
    %23 = vector.load %arg6[%c0_14, %c0_15] : memref<256x256xbf16, #tpu.memory_space<vmem>>, vector<256x256xbf16>
    %cst_16 = arith.constant dense<0.000000e+00> : vector<8x256xf32>
    %24 = tpu.matmul %22, %23, %cst_16 {dimension_numbers = #tpu.dot_dimension_numbers<[1], [0], [0], [1], [0, 0, 1, 1], [], []>} : vector<8x256xbf16>, vector<256x256xbf16>, vector<8x256xf32> -> vector<8x256xf32>
    %c0_17 = arith.constant 0 : index
    %c0_18 = arith.constant 0 : index
    %25 = vector.load %arg7[%c0_17, %c0_18] : memref<1x256xf32, #tpu.memory_space<vmem>>, vector<1x256xf32>
    %26 = vector.broadcast %25 : vector<1x256xf32> to vector<8x256xf32>
    %27 = arith.addf %24, %26 : vector<8x256xf32>
    %28 = arith.addf %27, %10 : vector<8x256xf32>
    %cst_19 = arith.constant 0.000000e+00 : f32
    %29 = vector.broadcast %cst_19 : f32 to vector<8x256xf32>
    %30 = arith.cmpf ogt, %28, %29 : vector<8x256xf32>
    %cst_20 = arith.constant 0.00999999977 : f32
    %31 = vector.broadcast %cst_20 : f32 to vector<8x256xf32>
    %32 = arith.mulf %31, %28 : vector<8x256xf32>
    %33 = arith.select %30, %28, %32 : vector<8x256xi1>, vector<8x256xf32>
    %34 = arith.truncf %33 : vector<8x256xf32> to vector<8x256xbf16>
    %c0_21 = arith.constant 0 : index
    %c0_22 = arith.constant 0 : index
    %35 = vector.load %arg8[%c0_21, %c0_22] : memref<256x128xbf16, #tpu.memory_space<vmem>>, vector<256x128xbf16>
    %cst_23 = arith.constant dense<0.000000e+00> : vector<8x128xf32>
    %36 = tpu.matmul %34, %35, %cst_23 {dimension_numbers = #tpu.dot_dimension_numbers<[1], [0], [0], [1], [0, 0, 1, 1], [], []>} : vector<8x256xbf16>, vector<256x128xbf16>, vector<8x128xf32> -> vector<8x128xf32>
    %c0_24 = arith.constant 0 : index
    %c0_25 = arith.constant 0 : index
    %37 = vector.load %arg9[%c0_24, %c0_25] : memref<1x128xf32, #tpu.memory_space<vmem>>, vector<1x128xf32>
    %38 = vector.broadcast %37 : vector<1x128xf32> to vector<8x128xf32>
    %39 = arith.addf %36, %38 : vector<8x128xf32>
    %c0_26 = arith.constant 0 : index
    %c0_27 = arith.constant 0 : index
    %40 = vector.load %arg10[%c0_26, %c0_27] : memref<8x128xf32, #tpu.memory_space<vmem>>, vector<8x128xf32>
    tpu.vector_store %arg10[%c0_26, %c0_27], %39 {strides = array<i32>} : memref<8x128xf32, #tpu.memory_space<vmem>>, vector<8x128xf32>,
    return
  }
  func.func @transform_0(%arg0: i32) -> (i32, i32) {
    %c0_i32 = arith.constant 0 : i32
    %c0_i32_0 = arith.constant 0 : i32
    return %arg0, %c0_i32 : i32, i32
  }
  func.func @transform_1(%arg0: i32) -> (i32, i32) {
    %c0_i32 = arith.constant 0 : i32
    %c0_i32_0 = arith.constant 0 : i32
    %c0_i32_1 = arith.constant 0 : i32
    return %c0_i32, %c0_i32_0 : i32, i32
  }
  func.func @transform_2(%arg0: i32) -> (i32, i32) {
    %c0_i32 = arith.constant 0 : i32
    %c0_i32_0 = arith.constant 0 : i32
    %c0_i32_1 = arith.constant 0 : i32
    return %c0_i32, %c0_i32_0 : i32, i32
  }
  func.func @transform_3(%arg0: i32) -> (i32, i32) {
    %c0_i32 = arith.constant 0 : i32
    %c0_i32_0 = arith.constant 0 : i32
    %c0_i32_1 = arith.constant 0 : i32
    return %c0_i32, %c0_i32_0 : i32, i32
  }
  func.func @transform_4(%arg0: i32) -> (i32, i32) {
    %c0_i32 = arith.constant 0 : i32
    %c0_i32_0 = arith.constant 0 : i32
    %c0_i32_1 = arith.constant 0 : i32
    return %c0_i32, %c0_i32_0 : i32, i32
  }
  func.func @transform_5(%arg0: i32) -> (i32, i32) {
    %c0_i32 = arith.constant 0 : i32
    %c0_i32_0 = arith.constant 0 : i32
    %c0_i32_1 = arith.constant 0 : i32
    return %c0_i32, %c0_i32_0 : i32, i32
  }
  func.func @transform_6(%arg0: i32) -> (i32, i32) {
    %c0_i32 = arith.constant 0 : i32
    %c0_i32_0 = arith.constant 0 : i32
    %c0_i32_1 = arith.constant 0 : i32
    return %c0_i32, %c0_i32_0 : i32, i32
  }
  func.func @transform_7(%arg0: i32) -> (i32, i32) {
    %c0_i32 = arith.constant 0 : i32
    %c0_i32_0 = arith.constant 0 : i32
    %c0_i32_1 = arith.constant 0 : i32
    return %c0_i32, %c0_i32_0 : i32, i32
  }
  func.func @transform_8(%arg0: i32) -> (i32, i32) {
    %c0_i32 = arith.constant 0 : i32
    %c0_i32_0 = arith.constant 0 : i32
    %c0_i32_1 = arith.constant 0 : i32
    return %c0_i32, %c0_i32_0 : i32, i32
  }
  func.func @transform_9(%arg0: i32) -> (i32, i32) {
    %c0_i32 = arith.constant 0 : i32
    %c0_i32_0 = arith.constant 0 : i32
    return %arg0, %c0_i32 : i32, i32
  }
}

</mosaic_0001>

<llo_original>
// kernel: gan3dpose_forward.1
$region0: #{gan3dpose_forward.1}
  #allocation0 [shape = 'u32[]', space=smem, size = 0x4, offset = 0x4, fixed_abs, tag = 'smem constant byte address 0x4 - core index']
  #allocation1 [shape = 'u32[144,128]{1,0:T(1,128)}', space=vmem, size = 0x12000, scoped, tag = 'internal scratch']
  %s0 = inlined_call_operand.vmem [shape: bf16[8,128], index: 0, kind: input, shape index: {}]
  %s1 = inlined_call_operand.vmem [shape: bf16[128,256], index: 1, kind: input, shape index: {}]
  %s2 = inlined_call_operand.vmem [shape: f32[1,256], index: 2, kind: input, shape index: {}]
  %s3 = inlined_call_operand.vmem [shape: bf16[256,256], index: 3, kind: input, shape index: {}]
  %s4 = inlined_call_operand.vmem [shape: f32[1,256], index: 4, kind: input, shape index: {}]
  %s5 = inlined_call_operand.vmem [shape: bf16[256,256], index: 5, kind: input, shape index: {}]
  %s6 = inlined_call_operand.vmem [shape: f32[1,256], index: 6, kind: input, shape index: {}]
  %s7 = inlined_call_operand.vmem [shape: bf16[256,128], index: 7, kind: input, shape index: {}]
  %s8 = inlined_call_operand.vmem [shape: f32[1,128], index: 8, kind: input, shape index: {}]
  %s9 = inlined_call_operand.hbm [shape: f32[8,128], index: 9, kind: output, shape index: {}]
  %s10 = sld [smem:[#allocation0]]
  $region46: #{gan3dpose_forward.1} parent=0
    _
  %s12 = ssub.s32 1, %s10
  %s13 = scalar_select 0, %s12, %s10
  $region1: #{gan3dpose_forward.1} parent=0
    #allocation2 [shape = 'u8[4096]{0}', space=vmem, size = 0x1000, scoped, tag = 'output window, operand 0, single buffered']
    #allocation3 [shape = 's32[1]{0}', space=sflag, size = 0x4, scoped, tag = 'scoped memory for gan3dpose_forward.1']
    %14 = vsyncpa [#allocation3], 0
    // Predicated region
    $region2: #{gan3dpose_forward.1} parent=1 // pred_check
      _
    $region3: #{gan3dpose_forward.1} parent=1 // pred_check_branch
      %16 = sbr.rel (0) target = $region5
    $region4: #{gan3dpose_forward.1} parent=1 // pred_region
      _
    $region5: #{gan3dpose_forward.1} parent=1 // pred_fallthru
      _
    // Predicated region
    $region6: #{gan3dpose_forward.1} parent=1 // pred_check
      _
    $region7: #{gan3dpose_forward.1} parent=1 // pred_check_branch
      %18 = sbr.rel (0) target = $region9
    $region8: #{gan3dpose_forward.1} parent=1 // pred_region
      _
    $region9: #{gan3dpose_forward.1} parent=1 // pred_fallthru
      _
    // Predicated region
    $region10: #{gan3dpose_forward.1} parent=1 // pred_check
      _
    $region11: #{gan3dpose_forward.1} parent=1 // pred_check_branch
      %20 = sbr.rel (0) target = $region13
    $region12: #{gan3dpose_forward.1} parent=1 // pred_region
      _
    $region13: #{gan3dpose_forward.1} parent=1 // pred_fallthru
      _
    // Predicated region
    $region14: #{gan3dpose_forward.1} parent=1 // pred_check
      _
    $region15: #{gan3dpose_forward.1} parent=1 // pred_check_branch
      %22 = sbr.rel (0) target = $region17
    $region16: #{gan3dpose_forward.1} parent=1 // pred_region
      _
    $region17: #{gan3dpose_forward.1} parent=1 // pred_fallthru
      _
    // Predicated region
    $region18: #{gan3dpose_forward.1} parent=1 // pred_check
      _
    $region19: #{gan3dpose_forward.1} parent=1 // pred_check_branch
      %24 = sbr.rel (0) target = $region21
    $region20: #{gan3dpose_forward.1} parent=1 // pred_region
      _
    $region21: #{gan3dpose_forward.1} parent=1 // pred_fallthru
      _
    // Predicated region
    $region22: #{gan3dpose_forward.1} parent=1 // pred_check
      _
    $region23: #{gan3dpose_forward.1} parent=1 // pred_check_branch
      %26 = sbr.rel (0) target = $region25
    $region24: #{gan3dpose_forward.1} parent=1 // pred_region
      _
    $region25: #{gan3dpose_forward.1} parent=1 // pred_fallthru
      _
    // Predicated region
    $region26: #{gan3dpose_forward.1} parent=1 // pred_check
      _
    $region27: #{gan3dpose_forward.1} parent=1 // pred_check_branch
      %28 = sbr.rel (0) target = $region29
    $region28: #{gan3dpose_forward.1} parent=1 // pred_region
      _
    $region29: #{gan3dpose_forward.1} parent=1 // pred_fallthru
      _
    // Predicated region
    $region30: #{gan3dpose_forward.1} parent=1 // pred_check
      _
    $region31: #{gan3dpose_forward.1} parent=1 // pred_check_branch
      %30 = sbr.rel (0) target = $region33
    $region32: #{gan3dpose_forward.1} parent=1 // pred_region
      _
    $region33: #{gan3dpose_forward.1} parent=1 // pred_fallthru
      _
    // Predicated region
    $region34: #{gan3dpose_forward.1} parent=1 // pred_check
      _
    $region35: #{gan3dpose_forward.1} parent=1 // pred_check_branch
      %32 = sbr.rel (0) target = $region37
    $region36: #{gan3dpose_forward.1} parent=1 // pred_region
      _
    $region37: #{gan3dpose_forward.1} parent=1 // pred_fallthru
      _
    %v34 = vld [vmem:[%s0] sm:$0xf]
    %v35 = vld [vmem:[%s1] sm:$0xff]
    %v36 = vld [vmem:[%s1 + $0x8] sm:$0xff]
    %v37 = vld [vmem:[%s1 + $0x10] sm:$0xff]
    %v38 = vld [vmem:[%s1 + $0x18] sm:$0xff]
    %v39 = vld [vmem:[%s1 + $0x20] sm:$0xff]
    %v40 = vld [vmem:[%s1 + $0x28] sm:$0xff]
    %v41 = vld [vmem:[%s1 + $0x30] sm:$0xff]
    %v42 = vld [vmem:[%s1 + $0x38] sm:$0xff]
    %v43 = vld [vmem:[%s1 + $0x40] sm:$0xff]
    %v44 = vld [vmem:[%s1 + $0x48] sm:$0xff]
    %v45 = vld [vmem:[%s1 + $0x50] sm:$0xff]
    %v46 = vld [vmem:[%s1 + $0x58] sm:$0xff]
    %v47 = vld [vmem:[%s1 + $0x60] sm:$0xff]
    %v48 = vld [vmem:[%s1 + $0x68] sm:$0xff]
    %v49 = vld [vmem:[%s1 + $0x70] sm:$0xff]
    %v50 = vld [vmem:[%s1 + $0x78] sm:$0xff]
    %v51 = vld [vmem:[%s2] sm:$0x3]
    %v53 = vlaneseq
    %v54 = vshrl.u32 %v53, 7
    %v55 = vsub.s32 0, %v54
    %v56 = vrot.slane %v51, %v55
    %v57 = vlaneseq
    %v58 = vshrl.u32 %v57, 7
    %v59 = vsub.s32 1, %v58
    %v60 = vrot.slane %v51, %v59
    %v79 = vunpack.c.l.b16 %v35
    %v80 = vunpack.c.h.b16 %v35
    %v81 = vunpack.c.l.b16 %v36
    %v82 = vunpack.c.h.b16 %v36
    %v83 = vunpack.c.l.b16 %v37
    %v84 = vunpack.c.h.b16 %v37
    %v85 = vunpack.c.l.b16 %v38
    %v86 = vunpack.c.h.b16 %v38
    %v87 = vunpack.c.l.b16 %v39
    %v88 = vunpack.c.h.b16 %v39
    %v89 = vunpack.c.l.b16 %v40
    %v90 = vunpack.c.h.b16 %v40
    %v91 = vunpack.c.l.b16 %v41
    %v92 = vunpack.c.h.b16 %v41
    %v93 = vunpack.c.l.b16 %v42
    %v94 = vunpack.c.h.b16 %v42
    %v95 = vunpack.c.l.b16 %v43
    %v96 = vunpack.c.h.b16 %v43
    %v97 = vunpack.c.l.b16 %v44
    %v98 = vunpack.c.h.b16 %v44
    %v99 = vunpack.c.l.b16 %v45
    %v100 = vunpack.c.h.b16 %v45
    %v101 = vunpack.c.l.b16 %v46
    %v102 = vunpack.c.h.b16 %v46
    %v103 = vunpack.c.l.b16 %v47
    %v104 = vunpack.c.h.b16 %v47
    %v105 = vunpack.c.l.b16 %v48
    %v106 = vunpack.c.h.b16 %v48
    %v107 = vunpack.c.l.b16 %v49
    %v108 = vunpack.c.h.b16 %v49
    %v109 = vunpack.c.l.b16 %v50
    %v110 = vunpack.c.h.b16 %v50
    %v111 = vpack.c.b16 %v81, %v79
    %v112 = vpack.c.b16 %v82, %v80
    %v113 = vpack.c.b16 %v85, %v83
    %v114 = vpack.c.b16 %v86, %v84
    %v115 = vpack.c.b16 %v89, %v87
    %v116 = vpack.c.b16 %v90, %v88
    %v117 = vpack.c.b16 %v93, %v91
    %v118 = vpack.c.b16 %v94, %v92
    %v119 = vpack.c.b16 %v97, %v95
    %v120 = vpack.c.b16 %v98, %v96
    %v121 = vpack.c.b16 %v101, %v99
    %v122 = vpack.c.b16 %v102, %v100
    %v123 = vpack.c.b16 %v105, %v103
    %v124 = vpack.c.b16 %v106, %v104
    %v125 = vpack.c.b16 %v109, %v107
    %v126 = vpack.c.b16 %v110, %v108
    %143 = vmatprep.subr.bf16.mxu0 %v126
    %144 = vmatpush1.bf16.msra.mxu0 %v125
    %145 = vmatprep.subr.bf16.mxu0 %v124
    %146 = vmatpush1.bf16.msra.mxu0 %v123
    %147 = vmatprep.subr.bf16.mxu0 %v122
    %148 = vmatpush1.bf16.msra.mxu0 %v121
    %149 = vmatprep.subr.bf16.mxu0 %v120
    %150 = vmatpush1.bf16.msra.mxu0 %v119
    %151 = vmatprep.subr.bf16.mxu0 %v118
    %152 = vmatpush1.bf16.msra.mxu0 %v117
    %153 = vmatprep.subr.bf16.mxu0 %v116
    %154 = vmatpush1.bf16.msra.mxu0 %v115
    %155 = vmatprep.subr.bf16.mxu0 %v114
    %156 = vmatpush1.bf16.msra.mxu0 %v113
    %157 = vmatprep.subr.bf16.mxu0 %v112
    %158 = vmatpush1.bf16.msra.mxu0 %v111
    %159 = vmatprep.subr.bf16.mxu0 0
    %160 = vmatpush2.bf16.msra.mxu0 0
    %161 = vmatprep.subr.bf16.mxu0 0
    %162 = vmatpush2.bf16.msra.mxu0 0
    %163 = vmatprep.subr.bf16.mxu0 0
    %164 = vmatpush2.bf16.msra.mxu0 0
    %165 = vmatprep.subr.bf16.mxu0 0
    %166 = vmatpush2.bf16.msra.mxu0 0
    %167 = vmatprep.subr.bf16.mxu0 0
    %168 = vmatpush2.bf16.msra.mxu0 0
    %169 = vmatprep.subr.bf16.mxu0 0
    %170 = vmatpush2.bf16.msra.mxu0 0
    %171 = vmatprep.subr.bf16.mxu0 0
    %172 = vmatpush2.bf16.msra.mxu0 0
    %173 = vmatprep.subr.bf16.mxu0 0
    %174 = vmatpush2.bf16.msra.mxu0 0
    %175 = vmatprep.mubr.bf16.mxu0 0
    %176 = vmatmul.mubr.bf16.gmra.mxu0 %v34
    %v177 = vpop.f32.mrf.mxu0
    %v178 = vadd.f32 %v56, %v177
    %v179 = vpop.f32.mrf.mxu0
    %v180 = vadd.f32 %v60, %v179
    %v181 = vpop.f32.mrf.mxu0
    %v182 = vpop.f32.mrf.mxu0
    %183 = vdwg.mxu0
    %vm184 = vcmp.gt.f32.partialorder %v178, 0.0
    %vm185 = vcmp.gt.f32.partialorder %v180, 0.0
    %v186 = vmul.f32 %v178, 0.01
    %v187 = vmul.f32 %v180, 0.01
    %v188 = vsel %vm184, %v178, %v186
    %v189 = vsel %vm185, %v180, %v187
    %v190 = vpack.c.bf16 %v188, %v188
    %v191 = vpack.c.bf16 %v189, %v189
    %v192 = vld [vmem:[%s3] sm:$0xff]
    %v193 = vld [vmem:[%s3 + $0x8] sm:$0xff]
    %v194 = vld [vmem:[%s3 + $0x10] sm:$0xff]
    %v195 = vld [vmem:[%s3 + $0x18] sm:$0xff]
    %v196 = vld [vmem:[%s3 + $0x20] sm:$0xff]
    %v197 = vld [vmem:[%s3 + $0x28] sm:$0xff]
    %v198 = vld [vmem:[%s3 + $0x30] sm:$0xff]
    %v199 = vld [vmem:[%s3 + $0x38] sm:$0xff]
    %v200 = vld [vmem:[%s3 + $0x40] sm:$0xff]
    %v201 = vld [vmem:[%s3 + $0x48] sm:$0xff]
    %v202 = vld [vmem:[%s3 + $0x50] sm:$0xff]
    %v203 = vld [vmem:[%s3 + $0x58] sm:$0xff]
    %v204 = vld [vmem:[%s3 + $0x60] sm:$0xff]
    %v205 = vld [vmem:[%s3 + $0x68] sm:$0xff]
    %v206 = vld [vmem:[%s3 + $0x70] sm:$0xff]
    %v207 = vld [vmem:[%s3 + $0x78] sm:$0xff]
    %v208 = vld [vmem:[%s3 + $0x80] sm:$0xff]
    %v209 = vld [vmem:[%s3 + $0x88] sm:$0xff]
    %v210 = vld [vmem:[%s3 + $0x90] sm:$0xff]
    %v211 = vld [vmem:[%s3 + $0x98] sm:$0xff]
    %v212 = vld [vmem:[%s3 + $0xa0] sm:$0xff]
    %v213 = vld [vmem:[%s3 + $0xa8] sm:$0xff]
    %v214 = vld [vmem:[%s3 + $0xb0] sm:$0xff]
    %v215 = vld [vmem:[%s3 + $0xb8] sm:$0xff]
    %v216 = vld [vmem:[%s3 + $0xc0] sm:$0xff]
    %v217 = vld [vmem:[%s3 + $0xc8] sm:$0xff]
    %v218 = vld [vmem:[%s3 + $0xd0] sm:$0xff]
    %v219 = vld [vmem:[%s3 + $0xd8] sm:$0xff]
    %v220 = vld [vmem:[%s3 + $0xe0] sm:$0xff]
    %v221 = vld [vmem:[%s3 + $0xe8] sm:$0xff]
    %v222 = vld [vmem:[%s3 + $0xf0] sm:$0xff]
    %v223 = vld [vmem:[%s3 + $0xf8] sm:$0xff]
    %v224 = vld [vmem:[%s4] sm:$0x3]
    %v226 = vlaneseq
    %v227 = vshrl.u32 %v226, 7
    %v228 = vsub.s32 0, %v227
    %v229 = vrot.slane %v224, %v228
    %v230 = vlaneseq
    %v231 = vshrl.u32 %v230, 7
    %v232 = vsub.s32 1, %v231
    %v233 = vrot.slane %v224, %v232
    %v268 = vunpack.c.l.b16 %v192
    %v269 = vunpack.c.h.b16 %v192
    %v270 = vunpack.c.l.b16 %v193
    %v271 = vunpack.c.h.b16 %v193
    %v272 = vunpack.c.l.b16 %v194
    %v273 = vunpack.c.h.b16 %v194
    %v274 = vunpack.c.l.b16 %v195
    %v275 = vunpack.c.h.b16 %v195
    %v276 = vunpack.c.l.b16 %v196
    %v277 = vunpack.c.h.b16 %v196
    %v278 = vunpack.c.l.b16 %v197
    %v279 = vunpack.c.h.b16 %v197
    %v280 = vunpack.c.l.b16 %v198
    %v281 = vunpack.c.h.b16 %v198
    %v282 = vunpack.c.l.b16 %v199
    %v283 = vunpack.c.h.b16 %v199
    %v284 = vunpack.c.l.b16 %v200
    %v285 = vunpack.c.h.b16 %v200
    %v286 = vunpack.c.l.b16 %v201
    %v287 = vunpack.c.h.b16 %v201
    %v288 = vunpack.c.l.b16 %v202
    %v289 = vunpack.c.h.b16 %v202
    %v290 = vunpack.c.l.b16 %v203
    %v291 = vunpack.c.h.b16 %v203
    %v292 = vunpack.c.l.b16 %v204
    %v293 = vunpack.c.h.b16 %v204
    %v294 = vunpack.c.l.b16 %v205
    %v295 = vunpack.c.h.b16 %v205
    %v296 = vunpack.c.l.b16 %v206
    %v297 = vunpack.c.h.b16 %v206
    %v298 = vunpack.c.l.b16 %v207
    %v299 = vunpack.c.h.b16 %v207
    %v300 = vunpack.c.l.b16 %v208
    %v301 = vunpack.c.h.b16 %v208
    %v302 = vunpack.c.l.b16 %v209
    %v303 = vunpack.c.h.b16 %v209
    %v304 = vunpack.c.l.b16 %v210
    %v305 = vunpack.c.h.b16 %v210
    %v306 = vunpack.c.l.b16 %v211
    %v307 = vunpack.c.h.b16 %v211
    %v308 = vunpack.c.l.b16 %v212
    %v309 = vunpack.c.h.b16 %v212
    %v310 = vunpack.c.l.b16 %v213
    %v311 = vunpack.c.h.b16 %v213
    %v312 = vunpack.c.l.b16 %v214
    %v313 = vunpack.c.h.b16 %v214
    %v314 = vunpack.c.l.b16 %v215
    %v315 = vunpack.c.h.b16 %v215
    %v316 = vunpack.c.l.b16 %v216
    %v317 = vunpack.c.h.b16 %v216
    %v318 = vunpack.c.l.b16 %v217
    %v319 = vunpack.c.h.b16 %v217
    %v320 = vunpack.c.l.b16 %v218
    %v321 = vunpack.c.h.b16 %v218
    %v322 = vunpack.c.l.b16 %v219
    %v323 = vunpack.c.h.b16 %v219
    %v324 = vunpack.c.l.b16 %v220
    %v325 = vunpack.c.h.b16 %v220
    %v326 = vunpack.c.l.b16 %v221
    %v327 = vunpack.c.h.b16 %v221
    %v328 = vunpack.c.l.b16 %v222
    %v329 = vunpack.c.h.b16 %v222
    %v330 = vunpack.c.l.b16 %v223
    %v331 = vunpack.c.h.b16 %v223
    %v332 = vpack.c.b16 %v270, %v268
    %v333 = vpack.c.b16 %v271, %v269
    %v334 = vpack.c.b16 %v274, %v272
    %v335 = vpack.c.b16 %v275, %v273
    %v336 = vpack.c.b16 %v278, %v276
    %v337 = vpack.c.b16 %v279, %v277
    %v338 = vpack.c.b16 %v282, %v280
    %v339 = vpack.c.b16 %v283, %v281
    %v340 = vpack.c.b16 %v286, %v284
    %v341 = vpack.c.b16 %v287, %v285
    %v342 = vpack.c.b16 %v290, %v288
    %v343 = vpack.c.b16 %v291, %v289
    %v344 = vpack.c.b16 %v294, %v292
    %v345 = vpack.c.b16 %v295, %v293
    %v346 = vpack.c.b16 %v298, %v296
    %v347 = vpack.c.b16 %v299, %v297
    %v348 = vpack.c.b16 %v302, %v300
    %v349 = vpack.c.b16 %v303, %v301
    %v350 = vpack.c.b16 %v306, %v304
    %v351 = vpack.c.b16 %v307, %v305
    %v352 = vpack.c.b16 %v310, %v308
    %v353 = vpack.c.b16 %v311, %v309
    %v354 = vpack.c.b16 %v314, %v312
    %v355 = vpack.c.b16 %v315, %v313
    %v356 = vpack.c.b16 %v318, %v316
    %v357 = vpack.c.b16 %v319, %v317
    %v358 = vpack.c.b16 %v322, %v320
    %v359 = vpack.c.b16 %v323, %v321
    %v360 = vpack.c.b16 %v326, %v324
    %v361 = vpack.c.b16 %v327, %v325
    %v362 = vpack.c.b16 %v330, %v328
    %v363 = vpack.c.b16 %v331, %v329
    %396 = vmatprep.subr.bf16.mxu0 %v347
    %397 = vmatpush1.bf16.msra.mxu0 %v346
    %398 = vmatprep.subr.bf16.mxu0 %v345
    %399 = vmatpush1.bf16.msra.mxu0 %v344
    %400 = vmatprep.subr.bf16.mxu0 %v343
    %401 = vmatpush1.bf16.msra.mxu0 %v342
    %402 = vmatprep.subr.bf16.mxu0 %v341
    %403 = vmatpush1.bf16.msra.mxu0 %v340
    %404 = vmatprep.subr.bf16.mxu0 %v339
    %405 = vmatpush1.bf16.msra.mxu0 %v338
    %406 = vmatprep.subr.bf16.mxu0 %v337
    %407 = vmatpush1.bf16.msra.mxu0 %v336
    %408 = vmatprep.subr.bf16.mxu0 %v335
    %409 = vmatpush1.bf16.msra.mxu0 %v334
    %410 = vmatprep.subr.bf16.mxu0 %v333
    %411 = vmatpush1.bf16.msra.mxu0 %v332
    %412 = vmatprep.subr.bf16.mxu0 %v363
    %413 = vmatpush2.bf16.msra.mxu0 %v362
    %414 = vmatprep.subr.bf16.mxu0 %v361
    %415 = vmatpush2.bf16.msra.mxu0 %v360
    %416 = vmatprep.subr.bf16.mxu0 %v359
    %417 = vmatpush2.bf16.msra.mxu0 %v358
    %418 = vmatprep.subr.bf16.mxu0 %v357
    %419 = vmatpush2.bf16.msra.mxu0 %v356
    %420 = vmatprep.subr.bf16.mxu0 %v355
    %421 = vmatpush2.bf16.msra.mxu0 %v354
    %422 = vmatprep.subr.bf16.mxu0 %v353
    %423 = vmatpush2.bf16.msra.mxu0 %v352
    %424 = vmatprep.subr.bf16.mxu0 %v351
    %425 = vmatpush2.bf16.msra.mxu0 %v350
    %426 = vmatprep.subr.bf16.mxu0 %v349
    %427 = vmatpush2.bf16.msra.mxu0 %v348
    %428 = vmatprep.mubr.bf16.mxu0 %v191
    %429 = vmatmul.mubr.bf16.gmra.mxu0 %v190
    %v430 = vpop.f32.mrf.mxu0
    %v431 = vadd.f32 %v229, %v430
    %v432 = vpop.f32.mrf.mxu0
    %v433 = vadd.f32 %v233, %v432
    %v434 = vpop.f32.mrf.mxu0
    %v435 = vpop.f32.mrf.mxu0
    %436 = vdwg.mxu0
    %vm437 = vcmp.gt.f32.partialorder %v431, 0.0
    %vm438 = vcmp.gt.f32.partialorder %v433, 0.0
    %v439 = vmul.f32 %v431, 0.01
    %v440 = vmul.f32 %v433, 0.01
    %v441 = vsel %vm437, %v431, %v439
    %v442 = vsel %vm438, %v433, %v440
    %v443 = vpack.c.bf16 %v441, %v441
    %v444 = vpack.c.bf16 %v442, %v442
    %v445 = vld [vmem:[%s5] sm:$0xff]
    %v446 = vld [vmem:[%s5 + $0x8] sm:$0xff]
    %v447 = vld [vmem:[%s5 + $0x10] sm:$0xff]
    %v448 = vld [vmem:[%s5 + $0x18] sm:$0xff]
    %v449 = vld [vmem:[%s5 + $0x20] sm:$0xff]
    %v450 = vld [vmem:[%s5 + $0x28] sm:$0xff]
    %v451 = vld [vmem:[%s5 + $0x30] sm:$0xff]
    %v452 = vld [vmem:[%s5 + $0x38] sm:$0xff]
    %v453 = vld [vmem:[%s5 + $0x40] sm:$0xff]
    %v454 = vld [vmem:[%s5 + $0x48] sm:$0xff]
    %v455 = vld [vmem:[%s5 + $0x50] sm:$0xff]
    %v456 = vld [vmem:[%s5 + $0x58] sm:$0xff]
    %v457 = vld [vmem:[%s5 + $0x60] sm:$0xff]
    %v458 = vld [vmem:[%s5 + $0x68] sm:$0xff]
    %v459 = vld [vmem:[%s5 + $0x70] sm:$0xff]
    %v460 = vld [vmem:[%s5 + $0x78] sm:$0xff]
    %v461 = vld [vmem:[%s5 + $0x80] sm:$0xff]
    %v462 = vld [vmem:[%s5 + $0x88] sm:$0xff]
    %v463 = vld [vmem:[%s5 + $0x90] sm:$0xff]
    %v464 = vld [vmem:[%s5 + $0x98] sm:$0xff]
    %v465 = vld [vmem:[%s5 + $0xa0] sm:$0xff]
    %v466 = vld [vmem:[%s5 + $0xa8] sm:$0xff]
    %v467 = vld [vmem:[%s5 + $0xb0] sm:$0xff]
    %v468 = vld [vmem:[%s5 + $0xb8] sm:$0xff]
    %v469 = vld [vmem:[%s5 + $0xc0] sm:$0xff]
    %v470 = vld [vmem:[%s5 + $0xc8] sm:$0xff]
    %v471 = vld [vmem:[%s5 + $0xd0] sm:$0xff]
    %v472 = vld [vmem:[%s5 + $0xd8] sm:$0xff]
    %v473 = vld [vmem:[%s5 + $0xe0] sm:$0xff]
    %v474 = vld [vmem:[%s5 + $0xe8] sm:$0xff]
    %v475 = vld [vmem:[%s5 + $0xf0] sm:$0xff]
    %v476 = vld [vmem:[%s5 + $0xf8] sm:$0xff]
    %v477 = vld [vmem:[%s6] sm:$0x3]
    %v479 = vlaneseq
    %v480 = vshrl.u32 %v479, 7
    %v481 = vsub.s32 0, %v480
    %v482 = vrot.slane %v477, %v481
    %v483 = vlaneseq
    %v484 = vshrl.u32 %v483, 7
    %v485 = vsub.s32 1, %v484
    %v486 = vrot.slane %v477, %v485
    %v521 = vunpack.c.l.b16 %v445
    %v522 = vunpack.c.h.b16 %v445
    %v523 = vunpack.c.l.b16 %v446
    %v524 = vunpack.c.h.b16 %v446
    %v525 = vunpack.c.l.b16 %v447
    %v526 = vunpack.c.h.b16 %v447
    %v527 = vunpack.c.l.b16 %v448
    %v528 = vunpack.c.h.b16 %v448
    %v529 = vunpack.c.l.b16 %v449
    %v530 = vunpack.c.h.b16 %v449
    %v531 = vunpack.c.l.b16 %v450
    %v532 = vunpack.c.h.b16 %v450
    %v533 = vunpack.c.l.b16 %v451
    %v534 = vunpack.c.h.b16 %v451
    %v535 = vunpack.c.l.b16 %v452
    %v536 = vunpack.c.h.b16 %v452
    %v537 = vunpack.c.l.b16 %v453
    %v538 = vunpack.c.h.b16 %v453
    %v539 = vunpack.c.l.b16 %v454
    %v540 = vunpack.c.h.b16 %v454
    %v541 = vunpack.c.l.b16 %v455
    %v542 = vunpack.c.h.b16 %v455
    %v543 = vunpack.c.l.b16 %v456
    %v544 = vunpack.c.h.b16 %v456
    %v545 = vunpack.c.l.b16 %v457
    %v546 = vunpack.c.h.b16 %v457
    %v547 = vunpack.c.l.b16 %v458
    %v548 = vunpack.c.h.b16 %v458
    %v549 = vunpack.c.l.b16 %v459
    %v550 = vunpack.c.h.b16 %v459
    %v551 = vunpack.c.l.b16 %v460
    %v552 = vunpack.c.h.b16 %v460
    %v553 = vunpack.c.l.b16 %v461
    %v554 = vunpack.c.h.b16 %v461
    %v555 = vunpack.c.l.b16 %v462
    %v556 = vunpack.c.h.b16 %v462
    %v557 = vunpack.c.l.b16 %v463
    %v558 = vunpack.c.h.b16 %v463
    %v559 = vunpack.c.l.b16 %v464
    %v560 = vunpack.c.h.b16 %v464
    %v561 = vunpack.c.l.b16 %v465
    %v562 = vunpack.c.h.b16 %v465
    %v563 = vunpack.c.l.b16 %v466
    %v564 = vunpack.c.h.b16 %v466
    %v565 = vunpack.c.l.b16 %v467
    %v566 = vunpack.c.h.b16 %v467
    %v567 = vunpack.c.l.b16 %v468
    %v568 = vunpack.c.h.b16 %v468
    %v569 = vunpack.c.l.b16 %v469
    %v570 = vunpack.c.h.b16 %v469
    %v571 = vunpack.c.l.b16 %v470
    %v572 = vunpack.c.h.b16 %v470
    %v573 = vunpack.c.l.b16 %v471
    %v574 = vunpack.c.h.b16 %v471
    %v575 = vunpack.c.l.b16 %v472
    %v576 = vunpack.c.h.b16 %v472
    %v577 = vunpack.c.l.b16 %v473
    %v578 = vunpack.c.h.b16 %v473
    %v579 = vunpack.c.l.b16 %v474
    %v580 = vunpack.c.h.b16 %v474
    %v581 = vunpack.c.l.b16 %v475
    %v582 = vunpack.c.h.b16 %v475
    %v583 = vunpack.c.l.b16 %v476
    %v584 = vunpack.c.h.b16 %v476
    %v585 = vpack.c.b16 %v523, %v521
    %v586 = vpack.c.b16 %v524, %v522
    %v587 = vpack.c.b16 %v527, %v525
    %v588 = vpack.c.b16 %v528, %v526
    %v589 = vpack.c.b16 %v531, %v529
    %v590 = vpack.c.b16 %v532, %v530
    %v591 = vpack.c.b16 %v535, %v533
    %v592 = vpack.c.b16 %v536, %v534
    %v593 = vpack.c.b16 %v539, %v537
    %v594 = vpack.c.b16 %v540, %v538
    %v595 = vpack.c.b16 %v543, %v541
    %v596 = vpack.c.b16 %v544, %v542
    %v597 = vpack.c.b16 %v547, %v545
    %v598 = vpack.c.b16 %v548, %v546
    %v599 = vpack.c.b16 %v551, %v549
    %v600 = vpack.c.b16 %v552, %v550
    %v601 = vpack.c.b16 %v555, %v553
    %v602 = vpack.c.b16 %v556, %v554
    %v603 = vpack.c.b16 %v559, %v557
    %v604 = vpack.c.b16 %v560, %v558
    %v605 = vpack.c.b16 %v563, %v561
    %v606 = vpack.c.b16 %v564, %v562
    %v607 = vpack.c.b16 %v567, %v565
    %v608 = vpack.c.b16 %v568, %v566
    %v609 = vpack.c.b16 %v571, %v569
    %v610 = vpack.c.b16 %v572, %v570
    %v611 = vpack.c.b16 %v575, %v573
    %v612 = vpack.c.b16 %v576, %v574
    %v613 = vpack.c.b16 %v579, %v577
    %v614 = vpack.c.b16 %v580, %v578
    %v615 = vpack.c.b16 %v583, %v581
    %v616 = vpack.c.b16 %v584, %v582
    %649 = vmatprep.subr.bf16.mxu0 %v600
    %650 = vmatpush1.bf16.msra.mxu0 %v599
    %651 = vmatprep.subr.bf16.mxu0 %v598
    %652 = vmatpush1.bf16.msra.mxu0 %v597
    %653 = vmatprep.subr.bf16.mxu0 %v596
    %654 = vmatpush1.bf16.msra.mxu0 %v595
    %655 = vmatprep.subr.bf16.mxu0 %v594
    %656 = vmatpush1.bf16.msra.mxu0 %v593
    %657 = vmatprep.subr.bf16.mxu0 %v592
    %658 = vmatpush1.bf16.msra.mxu0 %v591
    %659 = vmatprep.subr.bf16.mxu0 %v590
    %660 = vmatpush1.bf16.msra.mxu0 %v589
    %661 = vmatprep.subr.bf16.mxu0 %v588
    %662 = vmatpush1.bf16.msra.mxu0 %v587
    %663 = vmatprep.subr.bf16.mxu0 %v586
    %664 = vmatpush1.bf16.msra.mxu0 %v585
    %665 = vmatprep.subr.bf16.mxu0 %v616
    %666 = vmatpush2.bf16.msra.mxu0 %v615
    %667 = vmatprep.subr.bf16.mxu0 %v614
    %668 = vmatpush2.bf16.msra.mxu0 %v613
    %669 = vmatprep.subr.bf16.mxu0 %v612
    %670 = vmatpush2.bf16.msra.mxu0 %v611
    %671 = vmatprep.subr.bf16.mxu0 %v610
    %672 = vmatpush2.bf16.msra.mxu0 %v609
    %673 = vmatprep.subr.bf16.mxu0 %v608
    %674 = vmatpush2.bf16.msra.mxu0 %v607
    %675 = vmatprep.subr.bf16.mxu0 %v606
    %676 = vmatpush2.bf16.msra.mxu0 %v605
    %677 = vmatprep.subr.bf16.mxu0 %v604
    %678 = vmatpush2.bf16.msra.mxu0 %v603
    %679 = vmatprep.subr.bf16.mxu0 %v602
    %680 = vmatpush2.bf16.msra.mxu0 %v601
    %681 = vmatprep.mubr.bf16.mxu0 %v444
    %682 = vmatmul.mubr.bf16.gmra.mxu0 %v443
    %v683 = vpop.f32.mrf.mxu0
    %v684 = vadd.f32 %v482, %v683
    %v685 = vpop.f32.mrf.mxu0
    %v686 = vadd.f32 %v486, %v685
    %v687 = vpop.f32.mrf.mxu0
    %v688 = vpop.f32.mrf.mxu0
    %689 = vdwg.mxu0
    %v690 = vadd.f32 %v684, %v188
    %v691 = vadd.f32 %v686, %v189
    %vm692 = vcmp.gt.f32.partialorder %v690, 0.0
    %vm693 = vcmp.gt.f32.partialorder %v691, 0.0
    %v694 = vmul.f32 %v690, 0.01
    %v695 = vmul.f32 %v691, 0.01
    %v696 = vsel %vm692, %v690, %v694
    %v697 = vsel %vm693, %v691, %v695
    %v698 = vpack.c.bf16 %v696, %v696
    %v699 = vpack.c.bf16 %v697, %v697
    %v700 = vld [vmem:[%s7] sm:$0xf]
    %v701 = vld [vmem:[%s7 + $0x4] sm:$0xf]
    %v702 = vld [vmem:[%s7 + $0x8] sm:$0xf]
    %v703 = vld [vmem:[%s7 + $0xc] sm:$0xf]
    %v704 = vld [vmem:[%s7 + $0x10] sm:$0xf]
    %v705 = vld [vmem:[%s7 + $0x14] sm:$0xf]
    %v706 = vld [vmem:[%s7 + $0x18] sm:$0xf]
    %v707 = vld [vmem:[%s7 + $0x1c] sm:$0xf]
    %v708 = vld [vmem:[%s7 + $0x20] sm:$0xf]
    %v709 = vld [vmem:[%s7 + $0x24] sm:$0xf]
    %v710 = vld [vmem:[%s7 + $0x28] sm:$0xf]
    %v711 = vld [vmem:[%s7 + $0x2c] sm:$0xf]
    %v712 = vld [vmem:[%s7 + $0x30] sm:$0xf]
    %v713 = vld [vmem:[%s7 + $0x34] sm:$0xf]
    %v714 = vld [vmem:[%s7 + $0x38] sm:$0xf]
    %v715 = vld [vmem:[%s7 + $0x3c] sm:$0xf]
    %v716 = vld [vmem:[%s7 + $0x40] sm:$0xf]
    %v717 = vld [vmem:[%s7 + $0x44] sm:$0xf]
    %v718 = vld [vmem:[%s7 + $0x48] sm:$0xf]
    %v719 = vld [vmem:[%s7 + $0x4c] sm:$0xf]
    %v720 = vld [vmem:[%s7 + $0x50] sm:$0xf]
    %v721 = vld [vmem:[%s7 + $0x54] sm:$0xf]
    %v722 = vld [vmem:[%s7 + $0x58] sm:$0xf]
    %v723 = vld [vmem:[%s7 + $0x5c] sm:$0xf]
    %v724 = vld [vmem:[%s7 + $0x60] sm:$0xf]
    %v725 = vld [vmem:[%s7 + $0x64] sm:$0xf]
    %v726 = vld [vmem:[%s7 + $0x68] sm:$0xf]
    %v727 = vld [vmem:[%s7 + $0x6c] sm:$0xf]
    %v728 = vld [vmem:[%s7 + $0x70] sm:$0xf]
    %v729 = vld [vmem:[%s7 + $0x74] sm:$0xf]
    %v730 = vld [vmem:[%s7 + $0x78] sm:$0xf]
    %v731 = vld [vmem:[%s7 + $0x7c] sm:$0xf]
    %v732 = vld [vmem:[%s8] sm:$0x1]
    %v734 = vlaneseq
    %v735 = vshrl.u32 %v734, 7
    %v736 = vsub.s32 0, %v735
    %v737 = vrot.slane %v732, %v736
    %v771 = vunpack.c.l.b16 %v700
    %v772 = vunpack.c.l.b16 %v701
    %v773 = vunpack.c.l.b16 %v702
    %v774 = vunpack.c.l.b16 %v703
    %v775 = vunpack.c.l.b16 %v704
    %v776 = vunpack.c.l.b16 %v705
    %v777 = vunpack.c.l.b16 %v706
    %v778 = vunpack.c.l.b16 %v707
    %v779 = vunpack.c.l.b16 %v708
    %v780 = vunpack.c.l.b16 %v709
    %v781 = vunpack.c.l.b16 %v710
    %v782 = vunpack.c.l.b16 %v711
    %v783 = vunpack.c.l.b16 %v712
    %v784 = vunpack.c.l.b16 %v713
    %v785 = vunpack.c.l.b16 %v714
    %v786 = vunpack.c.l.b16 %v715
    %v787 = vunpack.c.l.b16 %v716
    %v788 = vunpack.c.l.b16 %v717
    %v789 = vunpack.c.l.b16 %v718
    %v790 = vunpack.c.l.b16 %v719
    %v791 = vunpack.c.l.b16 %v720
    %v792 = vunpack.c.l.b16 %v721
    %v793 = vunpack.c.l.b16 %v722
    %v794 = vunpack.c.l.b16 %v723
    %v795 = vunpack.c.l.b16 %v724
    %v796 = vunpack.c.l.b16 %v725
    %v797 = vunpack.c.l.b16 %v726
    %v798 = vunpack.c.l.b16 %v727
    %v799 = vunpack.c.l.b16 %v728
    %v800 = vunpack.c.l.b16 %v729
    %v801 = vunpack.c.l.b16 %v730
    %v802 = vunpack.c.l.b16 %v731
    %v803 = vpack.c.b16 %v772, %v771
    %v804 = vpack.c.b16 %v774, %v773
    %v805 = vpack.c.b16 %v776, %v775
    %v806 = vpack.c.b16 %v778, %v777
    %v807 = vpack.c.b16 %v780, %v779
    %v808 = vpack.c.b16 %v782, %v781
    %v809 = vpack.c.b16 %v784, %v783
    %v810 = vpack.c.b16 %v786, %v785
    %v811 = vpack.c.b16 %v788, %v787
    %v812 = vpack.c.b16 %v790, %v789
    %v813 = vpack.c.b16 %v792, %v791
    %v814 = vpack.c.b16 %v794, %v793
    %v815 = vpack.c.b16 %v796, %v795
    %v816 = vpack.c.b16 %v798, %v797
    %v817 = vpack.c.b16 %v800, %v799
    %v818 = vpack.c.b16 %v802, %v801
    %835 = vmatprep.subr.bf16.mxu0 0
    %836 = vmatpush1.bf16.msra.mxu0 %v810
    %837 = vmatprep.subr.bf16.mxu0 0
    %838 = vmatpush1.bf16.msra.mxu0 %v809
    %839 = vmatprep.subr.bf16.mxu0 0
    %840 = vmatpush1.bf16.msra.mxu0 %v808
    %841 = vmatprep.subr.bf16.mxu0 0
    %842 = vmatpush1.bf16.msra.mxu0 %v807
    %843 = vmatprep.subr.bf16.mxu0 0
    %844 = vmatpush1.bf16.msra.mxu0 %v806
    %845 = vmatprep.subr.bf16.mxu0 0
    %846 = vmatpush1.bf16.msra.mxu0 %v805
    %847 = vmatprep.subr.bf16.mxu0 0
    %848 = vmatpush1.bf16.msra.mxu0 %v804
    %849 = vmatprep.subr.bf16.mxu0 0
    %850 = vmatpush1.bf16.msra.mxu0 %v803
    %851 = vmatprep.subr.bf16.mxu0 0
    %852 = vmatpush2.bf16.msra.mxu0 %v818
    %853 = vmatprep.subr.bf16.mxu0 0
    %854 = vmatpush2.bf16.msra.mxu0 %v817
    %855 = vmatprep.subr.bf16.mxu0 0
    %856 = vmatpush2.bf16.msra.mxu0 %v816
    %857 = vmatprep.subr.bf16.mxu0 0
    %858 = vmatpush2.bf16.msra.mxu0 %v815
    %859 = vmatprep.subr.bf16.mxu0 0
    %860 = vmatpush2.bf16.msra.mxu0 %v814
    %861 = vmatprep.subr.bf16.mxu0 0
    %862 = vmatpush2.bf16.msra.mxu0 %v813
    %863 = vmatprep.subr.bf16.mxu0 0
    %864 = vmatpush2.bf16.msra.mxu0 %v812
    %865 = vmatprep.subr.bf16.mxu0 0
    %866 = vmatpush2.bf16.msra.mxu0 %v811
    %867 = vmatprep.mubr.bf16.mxu0 %v699
    %868 = vmatmul.mubr.bf16.gmra.mxu0 %v698
    %v869 = vpop.f32.mrf.mxu0
    %v870 = vadd.f32 %v737, %v869
    %v871 = vpop.f32.mrf.mxu0
    %v872 = vpop.f32.mrf.mxu0
    %v873 = vpop.f32.mrf.mxu0
    %874 = vdwg.mxu0
    %875 = vst [vmem:[#allocation2] sm:$0xff] %v870
    // Predicated region
    $region38: #{gan3dpose_forward.1} parent=1 // pred_check
      _
    $region39: #{gan3dpose_forward.1} parent=1 // pred_check_branch
      %877 = sbr.rel (0) target = $region41
    $region40: #{gan3dpose_forward.1} parent=1 // pred_region
      %s879 = ssub.s32 128, 128
      %880 = vsyncadd [#allocation3], %s879
      %s882 = sshll.u32 [#allocation2], 4
      %s883 = int_to_ptr.vmem [resolvable:$true] %s882
      %885 = dma.vmem_to_hbm [thread:$0]  %s883, 128, %s9, [#allocation3]
    $region41: #{gan3dpose_forward.1} parent=1 // pred_fallthru
      _
    // Predicated region
    $region42: #{gan3dpose_forward.1} parent=1 // pred_check
      _
    $region43: #{gan3dpose_forward.1} parent=1 // pred_check_branch
      %887 = sbr.rel (0) target = $region45
    $region44: #{gan3dpose_forward.1} parent=1 // pred_region
      %888 = dma.done [#allocation3], 128
    $region45: #{gan3dpose_forward.1} parent=1 // pred_fallthru
      _
    %889 = vsyncpa [#allocation3], 1

</llo_original>
